<compile_context>
chip_gen: v5e
topology: v5e:2x2
jax: 0.10.0
libtpu: 0.0.40
codegen_flags: <defaults>
</compile_context>

<pallas_src>
import jax
import jax.numpy as jnp
from jax.experimental import pallas as pl
from jax.experimental.pallas import tpu as pltpu


# ---------------------------------------------------------------------------
# Path 1: true no-op identity (output aliases input; nothing to do).
# ---------------------------------------------------------------------------
def _silence_alias_kernel(x_ref, o_ref):
    # o_ref is the very same HBM buffer as x_ref (input_output_aliases={0: 0});
    # the identity therefore requires no data movement at all.
    del x_ref, o_ref


def silence_forward(x):
    """Silence.forward(x) == x, as a zero-copy (aliased) Pallas call."""
    return pl.pallas_call(
        _silence_alias_kernel,
        out_shape=jax.ShapeDtypeStruct(x.shape, x.dtype),
        in_specs=[pl.BlockSpec(memory_space=pl.ANY)],
        out_specs=pl.BlockSpec(memory_space=pl.ANY),
        input_output_aliases={0: 0},
    )(x)


# ---------------------------------------------------------------------------
# Path 2: materialized copy via one HBM->HBM DMA (fresh output buffer).
# ---------------------------------------------------------------------------
def _silence_dma_copy_kernel(x_ref, o_ref, sem):
    copy = pltpu.make_async_copy(x_ref, o_ref, sem)
    copy.start()
    copy.wait()


def silence_copy(x):
    """Identity that returns a fresh buffer: a single HBM->HBM DMA, no tiling."""
    nbytes = x.size * x.dtype.itemsize
    return pl.pallas_call(
        _silence_dma_copy_kernel,
        out_shape=jax.ShapeDtypeStruct(x.shape, x.dtype),
        in_specs=[pl.BlockSpec(memory_space=pl.ANY)],
        out_specs=pl.BlockSpec(memory_space=pl.ANY),
        scratch_shapes=[pltpu.SemaphoreType.DMA],
        cost_estimate=pl.CostEstimate(
            flops=0, transcendentals=0, bytes_accessed=2 * nbytes),
    )(x)


if __name__ == "__main__":
    key = jax.random.PRNGKey(0)
    B, C, H, W = 2, 4, 16, 16
    x = jax.random.normal(key, (B, C, H, W), dtype=jnp.float32)

    # Zero-copy (aliased) identity.
    out = jax.block_until_ready(silence_forward(x))
    assert out.shape == x.shape
    assert out.dtype == x.dtype
    assert bool(jnp.array_equal(out, x))

    # Fresh-buffer identity via direct HBM->HBM DMA.
    out_copy = jax.block_until_ready(silence_copy(x))
    assert out_copy.shape == x.shape
    assert out_copy.dtype == x.dtype
    assert bool(jnp.array_equal(out_copy, x))

    # Non-(8,128)-aligned shape: no padding / tiling needed on either path.
    y = jax.random.normal(jax.random.PRNGKey(1), (3, 5, 7), dtype=jnp.float32)
    out_y = jax.block_until_ready(silence_forward(y))
    assert out_y.shape == y.shape and bool(jnp.array_equal(out_y, y))
    out_y_copy = jax.block_until_ready(silence_copy(y))
    assert out_y_copy.shape == y.shape and bool(jnp.array_equal(out_y_copy, y))

    print("KERNEL_OK")
</pallas_src>

<mosaic_0001>
module attributes {stable_mosaic.version = 11 : i64} {
  func.func @_silence_alias_kernel(%arg0: memref<2x4x16x16xf32, #tpu.memory_space<any>>, %arg1: memref<2x4x16x16xf32, #tpu.memory_space<any>>) attributes {dimension_semantics = [], scalar_prefetch = 0 : i64, scratch_operands = 0 : i64, tpu.core_type = #tpu.core_type<tc>} {
    return
  }
}

</mosaic_0001>

<llo_original>
// kernel: tpu_custom_call.1
$region0: #{tpu_custom_call.1}
  #allocation0 [shape = 'u32[]', space=smem, size = 0x4, offset = 0x4, fixed_abs, tag = 'smem constant byte address 0x4 - core index']
  #allocation1 [shape = 'u32[72,128]{1,0:T(1,128)}', space=vmem, size = 0x9000, scoped, tag = 'internal scratch']
  %s0 = inlined_call_operand.hbm [shape: f32[2,4,16,16], index: 0, kind: input, shape index: {}, may-alias: {0,1}]
  %s1 = inlined_call_operand.hbm [shape: f32[2,4,16,16], index: 1, kind: output, shape index: {}, may-alias: {0,1}]
  %s2 = sld [smem:[#allocation0]]
  $region2: #{tpu_custom_call.1} parent=0
    _
  %s4 = ssub.s32 1, %s2
  %s5 = scalar_select 0, %s4, %s2

</llo_original>
